<compile_context>
chip_gen: v7x
topology: tpu7x:2x2x1
jax: 0.10.0
libtpu: 0.0.40
codegen_flags: <defaults>
</compile_context>

<pallas_src>
import jax
import jax.numpy as jnp
from jax.experimental import pallas as pl
from jax.experimental.pallas import tpu as pltpu

LANE = 128           # lane alignment for the embedding dimension
N_ALIGN = 128        # row-count alignment (lane-dense one-hot / clean MXU contraction)
ROWS_PER_STEP = 128  # lookups gathered per grid step (128-512 per perf review)


def _round_up(x: int, m: int) -> int:
    return ((x + m - 1) // m) * m


def _probe_single_buffered_table() -> bool:
    """Whether this Pallas build accepts pipeline_mode=pl.Buffered(1) on a
    resident-input BlockSpec (v7x VMEM-footprint optimization).  If not, we
    silently fall back to the default double-buffered spec."""
    try:
        def _copy_kernel(x_ref, o_ref):
            o_ref[...] = x_ref[...]

        fn = pl.pallas_call(
            _copy_kernel,
            out_shape=jax.ShapeDtypeStruct((8, 128), jnp.float32),
            grid=(1,),
            in_specs=[pl.BlockSpec((8, 128), lambda i: (0, 0),
                                   pipeline_mode=pl.Buffered(1))],
            out_specs=pl.BlockSpec((8, 128), lambda i: (0, 0)),
        )
        jax.jit(fn).lower(jax.ShapeDtypeStruct((8, 128), jnp.float32)).compile()
        return True
    except Exception:  # depends on jax / Mosaic version
        return False


_SINGLE_BUFFER_TABLE_OK = _probe_single_buffered_table()


def _gather_kernel(idx_ref, table_ref, out_ref):
    """One-hot-MXU gather of a full [ROWS, D_pad] output block.

    idx_ref:   VMEM int32 [ROWS, 1]        (indices for this grid step)
    table_ref: VMEM f32   [N_pad, D_pad]   (full table, resident across steps)
    out_ref:   VMEM f32   [ROWS, D_pad]
    """
    rows = idx_ref.shape[0]
    n_pad = table_ref.shape[0]
    # one_hot[r, n] == 1  iff  idx[r] == n  (any OOB index -> all-zero row).
    one_hot = (
        jax.lax.broadcasted_iota(jnp.int32, (rows, n_pad), 1) == idx_ref[...]
    ).astype(table_ref.dtype)
    # Selection matmul on the otherwise-idle MXU; single unmasked full-tile store.
    out_ref[...] = jnp.dot(
        one_hot,
        table_ref[...],
        preferred_element_type=jnp.float32,
        precision=jax.lax.Precision.HIGHEST,
    ).astype(out_ref.dtype)


def _batched_lookup(table_padded: jax.Array, idx_2d: jax.Array,
                    *, single_buffer_table: bool) -> jax.Array:
    """Padded batched gather: [B_pad, 1] indices -> [B_pad, D_pad] rows."""
    n_pad, d_pad = table_padded.shape
    b_pad = idx_2d.shape[0]
    assert b_pad % ROWS_PER_STEP == 0
    steps = b_pad // ROWS_PER_STEP

    table_spec_kwargs = {}
    table_buffers = 2
    if single_buffer_table:
        table_spec_kwargs["pipeline_mode"] = pl.Buffered(1)
        table_buffers = 1

    itemsize = table_padded.dtype.itemsize
    table_bytes = n_pad * d_pad * itemsize
    out_block_bytes = ROWS_PER_STEP * d_pad * itemsize
    idx_block_bytes = ROWS_PER_STEP * 4
    onehot_bytes = ROWS_PER_STEP * n_pad * 4
    vmem_est = (table_bytes * table_buffers
                + 2 * (out_block_bytes + idx_block_bytes)
                + 2 * onehot_bytes
                + (4 << 20))  # headroom for compiler-internal scratch
    # Floor at the v6e/v7x default (never worse than default), cap below v7x physical.
    vmem_limit = int(min(max(vmem_est, 32 << 20), 60 << 20))

    return pl.pallas_call(
        _gather_kernel,
        out_shape=jax.ShapeDtypeStruct((b_pad, d_pad), table_padded.dtype),
        grid_spec=pltpu.PrefetchScalarGridSpec(
            num_scalar_prefetch=0,
            grid=(steps,),
            in_specs=[
                # Per-step index column (tiny).
                pl.BlockSpec((ROWS_PER_STEP, 1), lambda i: (i, 0)),
                # Full table, constant block index -> resident across all steps.
                pl.BlockSpec((n_pad, d_pad), lambda i: (0, 0), **table_spec_kwargs),
            ],
            # Lane-dense, (8,128)-aligned output block per grid step.
            out_specs=pl.BlockSpec((ROWS_PER_STEP, d_pad), lambda i: (i, 0)),
        ),
        compiler_params=pltpu.CompilerParams(
            dimension_semantics=("parallel",),   # batch axis independent (megacore)
            vmem_limit_bytes=vmem_limit,
        ),
    )(idx_2d, table_padded)


def _lookup_impl(table_padded: jax.Array, indices: jax.Array,
                 embed_dim: int, single_buffer_table: bool) -> jax.Array:
    """indices: int32 [B] -> embeddings [B, embed_dim] (un-padded view)."""
    b = indices.shape[0]
    n_pad = table_padded.shape[0]
    b_pad = _round_up(max(b, ROWS_PER_STEP), ROWS_PER_STEP)
    # Single vectorized clamp in the wrapper (kernel itself is OOB-safe via one-hot).
    idx = jnp.clip(indices.astype(jnp.int32), 0, n_pad - 1)
    idx_2d = jnp.zeros((b_pad, 1), jnp.int32).at[:b, 0].set(idx)
    out_padded = _batched_lookup(table_padded, idx_2d,
                                 single_buffer_table=single_buffer_table)
    return out_padded[:b, :embed_dim]


class CategoryEmbedding:
    """JAX/Pallas port of the PyTorch CategoryEmbedding module."""

    def __init__(self, category_list, embed_dim, key):
        self.category_to_index = {c: i for i, c in enumerate(category_list)}
        self.embed_dim = embed_dim
        n = len(category_list)

        # nn.Embedding default init ~ N(0, 1); logical (un-padded) weights kept
        # for reference / inspection.
        self.embed_weight = jax.random.normal(key, (n, embed_dim), dtype=jnp.float32)

        # Padded table: rows to a multiple of 128 (lane-dense one-hot, clean MXU
        # contraction), embed_dim to a multiple of 128 (lane-dense output tiles).
        n_pad = _round_up(max(n, N_ALIGN), N_ALIGN)
        d_pad = _round_up(max(embed_dim, LANE), LANE)
        table_padded = (
            jnp.zeros((n_pad, d_pad), jnp.float32)
            .at[:n, :embed_dim]
            .set(self.embed_weight)
        )
        self._table_padded = jax.device_put(table_padded)
        self._single_buffer_table = _SINGLE_BUFFER_TABLE_OK

        # jit the full lookup path (padding + pallas_call + slice) once.
        self._lookup = jax.jit(_lookup_impl, static_argnums=(2, 3))

    def forward_batch(self, categories):
        """Batched lookup: list of category names -> [B, embed_dim]."""
        idx = jnp.asarray(
            [self.category_to_index[c] for c in categories], dtype=jnp.int32
        )
        return self._lookup(self._table_padded, idx, self.embed_dim,
                            self._single_buffer_table)

    def forward(self, category):
        """Single lookup, matches nn.Embedding(index).squeeze(0)."""
        return self.forward_batch([category])[0]

    def __getitem__(self, category):
        return self.forward(category)


if __name__ == "__main__":
    key = jax.random.PRNGKey(0)

    category_list = ["cat", "dog", "bird", "fish", "lizard", "frog", "horse", "snake"]
    embed_dim = 32

    module = CategoryEmbedding(category_list, embed_dim, key)

    # Single-category forward (the module's original semantics).
    out = jax.block_until_ready(module["bird"])
    ref = module.embed_weight[module.category_to_index["bird"]]
    assert out.shape == (embed_dim,)
    assert jnp.allclose(out, ref), "Pallas single-lookup mismatch"

    # Batched lookup (the performant path): all categories in one kernel call.
    batch_out = jax.block_until_ready(module.forward_batch(category_list))
    assert batch_out.shape == (len(category_list), embed_dim)
    assert jnp.allclose(batch_out, module.embed_weight), "Pallas batched lookup mismatch"

    print("KERNEL_OK")
</pallas_src>

<mosaic_0001>
module attributes {stable_mosaic.version = 11 : i64} {
  func.func @_gather_kernel(%arg0: i32, %arg1: memref<128x1xi32, #tpu.memory_space<vmem>>, %arg2: memref<128x128xf32, #tpu.memory_space<vmem>>, %arg3: memref<128x128xf32, #tpu.memory_space<vmem>>) attributes {dimension_semantics = [#tpu.dimension_semantics<parallel>], iteration_bounds = array<i64: 1>, scalar_prefetch = 0 : i64, scratch_operands = 0 : i64, tpu.core_type = #tpu.core_type<tc>, window_params = [{transform_indices = @transform_0, window_bounds = array<i64: 128, 1>}, {pipeline_mode = #tpu.pipeline_mode<synchronous>, transform_indices = @transform_1, window_bounds = array<i64: 128, 128>}, {transform_indices = @transform_2, window_bounds = array<i64: 128, 128>}]} {
    %0 = tpu.iota {dimensions = array<i32: 1>} : vector<128x128xi32>
    %c0 = arith.constant 0 : index
    %c0_0 = arith.constant 0 : index
    %1 = vector.load %arg1[%c0, %c0_0] : memref<128x1xi32, #tpu.memory_space<vmem>>, vector<128x1xi32>
    %2 = vector.broadcast %1 : vector<128x1xi32> to vector<128x128xi32>
    %3 = arith.cmpi eq, %0, %2 : vector<128x128xi32>
    %4 = arith.extui %3 : vector<128x128xi1> to vector<128x128xi32>
    %5 = arith.sitofp %4 : vector<128x128xi32> to vector<128x128xf32>
    %c0_1 = arith.constant 0 : index
    %c0_2 = arith.constant 0 : index
    %6 = vector.load %arg2[%c0_1, %c0_2] : memref<128x128xf32, #tpu.memory_space<vmem>>, vector<128x128xf32>
    %cst = arith.constant dense<0.000000e+00> : vector<128x128xf32>
    %7 = tpu.matmul %5, %6, %cst {dimension_numbers = #tpu.dot_dimension_numbers<[1], [0], [0], [1], [0, 0, 1, 1], [], []>, precision = #tpu.contract_precision<fp32>} : vector<128x128xf32>, vector<128x128xf32>, vector<128x128xf32> -> vector<128x128xf32>
    %c0_3 = arith.constant 0 : index
    %c0_4 = arith.constant 0 : index
    %8 = vector.load %arg3[%c0_3, %c0_4] : memref<128x128xf32, #tpu.memory_space<vmem>>, vector<128x128xf32>
    tpu.vector_store %arg3[%c0_3, %c0_4], %7 {strides = array<i32>} : memref<128x128xf32, #tpu.memory_space<vmem>>, vector<128x128xf32>,
    return
  }
  func.func @transform_0(%arg0: i32) -> (i32, i32) {
    %c0_i32 = arith.constant 0 : i32
    %c0_i32_0 = arith.constant 0 : i32
    return %arg0, %c0_i32 : i32, i32
  }
  func.func @transform_1(%arg0: i32) -> (i32, i32) {
    %c0_i32 = arith.constant 0 : i32
    %c0_i32_0 = arith.constant 0 : i32
    %c0_i32_1 = arith.constant 0 : i32
    return %c0_i32, %c0_i32_0 : i32, i32
  }
  func.func @transform_2(%arg0: i32) -> (i32, i32) {
    %c0_i32 = arith.constant 0 : i32
    %c0_i32_0 = arith.constant 0 : i32
    return %arg0, %c0_i32 : i32, i32
  }
}

</mosaic_0001>

<llo_original>
// kernel: _lookup_impl.1
$region0: #{_lookup_impl.1}
  #allocation0 [shape = 'u32[]', space=smem, size = 0x4, offset = 0x4, fixed_abs, tag = 'smem constant byte address 0x4 - core index']
  #allocation1 [shape = 'u32[144,128]{1,0:T(1,128)}', space=vmem, size = 0x12000, scoped, tag = 'internal scratch']
  %s0 = inlined_call_operand.vmem [shape: s32[128,1], index: 0, kind: input, shape index: {}]
  %s1 = inlined_call_operand.vmem [shape: f32[128,128], index: 1, kind: input, shape index: {}]
  %s2 = inlined_call_operand.vmem [shape: f32[128,128], index: 2, kind: output, shape index: {}]
  %s3 = sld [smem:[#allocation0]]
  $region18: #{_lookup_impl.1} parent=0
    _
  %s5 = ssub.s32 1, %s3
  %s6 = scalar_select 0, %s5, %s3
  // Predicated region
  $region2: #{_lookup_impl.1} parent=0 // pred_check
    _
  $region3: #{_lookup_impl.1} parent=0 // pred_check_branch
    %8 = sbr.rel (0) target = $region5
  $region4: #{_lookup_impl.1} parent=0 // pred_region
    _
  $region5: #{_lookup_impl.1} parent=0 // pred_fallthru
    _
  // Predicated region
  $region6: #{_lookup_impl.1} parent=0 // pred_check
    _
  $region7: #{_lookup_impl.1} parent=0 // pred_check_branch
    %10 = sbr.rel (0) target = $region9
  $region8: #{_lookup_impl.1} parent=0 // pred_region
    _
  $region9: #{_lookup_impl.1} parent=0 // pred_fallthru
    _
  %v11 = vlaneseq
  %v12 = vand.u32 %v11, 127
  %v13 = vld [vmem:[%s0] sm:$0xff]
  %v14 = vld [vmem:[%s0 + $0x8] sm:$0xff]
  %v15 = vld [vmem:[%s0 + $0x10] sm:$0xff]
  %v16 = vld [vmem:[%s0 + $0x18] sm:$0xff]
  %v17 = vld [vmem:[%s0 + $0x20] sm:$0xff]
  %v18 = vld [vmem:[%s0 + $0x28] sm:$0xff]
  %v19 = vld [vmem:[%s0 + $0x30] sm:$0xff]
  %v20 = vld [vmem:[%s0 + $0x38] sm:$0xff]
  %v21 = vld [vmem:[%s0 + $0x40] sm:$0xff]
  %v22 = vld [vmem:[%s0 + $0x48] sm:$0xff]
  %v23 = vld [vmem:[%s0 + $0x50] sm:$0xff]
  %v24 = vld [vmem:[%s0 + $0x58] sm:$0xff]
  %v25 = vld [vmem:[%s0 + $0x60] sm:$0xff]
  %v26 = vld [vmem:[%s0 + $0x68] sm:$0xff]
  %v27 = vld [vmem:[%s0 + $0x70] sm:$0xff]
  %v28 = vld [vmem:[%s0 + $0x78] sm:$0xff]
  %29 = vset.pattern.permute.xlu0 0
  %30 = vperm.xlu0 %29, %v13
  %v31 = vpop.permute.xlu0 %30
  %32 = vset.pattern.permute.xlu0 0
  %33 = vperm.xlu0 %32, %v14
  %v34 = vpop.permute.xlu0 %33
  %35 = vset.pattern.permute.xlu0 0
  %36 = vperm.xlu0 %35, %v15
  %v37 = vpop.permute.xlu0 %36
  %38 = vset.pattern.permute.xlu0 0
  %39 = vperm.xlu0 %38, %v16
  %v40 = vpop.permute.xlu0 %39
  %41 = vset.pattern.permute.xlu0 0
  %42 = vperm.xlu0 %41, %v17
  %v43 = vpop.permute.xlu0 %42
  %44 = vset.pattern.permute.xlu0 0
  %45 = vperm.xlu0 %44, %v18
  %v46 = vpop.permute.xlu0 %45
  %47 = vset.pattern.permute.xlu0 0
  %48 = vperm.xlu0 %47, %v19
  %v49 = vpop.permute.xlu0 %48
  %50 = vset.pattern.permute.xlu0 0
  %51 = vperm.xlu0 %50, %v20
  %v52 = vpop.permute.xlu0 %51
  %53 = vset.pattern.permute.xlu0 0
  %54 = vperm.xlu0 %53, %v21
  %v55 = vpop.permute.xlu0 %54
  %56 = vset.pattern.permute.xlu0 0
  %57 = vperm.xlu0 %56, %v22
  %v58 = vpop.permute.xlu0 %57
  %59 = vset.pattern.permute.xlu0 0
  %60 = vperm.xlu0 %59, %v23
  %v61 = vpop.permute.xlu0 %60
  %62 = vset.pattern.permute.xlu0 0
  %63 = vperm.xlu0 %62, %v24
  %v64 = vpop.permute.xlu0 %63
  %65 = vset.pattern.permute.xlu0 0
  %66 = vperm.xlu0 %65, %v25
  %v67 = vpop.permute.xlu0 %66
  %68 = vset.pattern.permute.xlu0 0
  %69 = vperm.xlu0 %68, %v26
  %v70 = vpop.permute.xlu0 %69
  %71 = vset.pattern.permute.xlu0 0
  %72 = vperm.xlu0 %71, %v27
  %v73 = vpop.permute.xlu0 %72
  %74 = vset.pattern.permute.xlu0 0
  %75 = vperm.xlu0 %74, %v28
  %v76 = vpop.permute.xlu0 %75
  %vm77 = vcmp.eq.s32.totalorder %v12, %v31
  %vm78 = vcmp.eq.s32.totalorder %v12, %v34
  %vm79 = vcmp.eq.s32.totalorder %v12, %v37
  %vm80 = vcmp.eq.s32.totalorder %v12, %v40
  %vm81 = vcmp.eq.s32.totalorder %v12, %v43
  %vm82 = vcmp.eq.s32.totalorder %v12, %v46
  %vm83 = vcmp.eq.s32.totalorder %v12, %v49
  %vm84 = vcmp.eq.s32.totalorder %v12, %v52
  %vm85 = vcmp.eq.s32.totalorder %v12, %v55
  %vm86 = vcmp.eq.s32.totalorder %v12, %v58
  %vm87 = vcmp.eq.s32.totalorder %v12, %v61
  %vm88 = vcmp.eq.s32.totalorder %v12, %v64
  %vm89 = vcmp.eq.s32.totalorder %v12, %v67
  %vm90 = vcmp.eq.s32.totalorder %v12, %v70
  %vm91 = vcmp.eq.s32.totalorder %v12, %v73
  %vm92 = vcmp.eq.s32.totalorder %v12, %v76
  %v93 = vsel %vm77, 1, 0
  %v94 = vsel %vm78, 1, 0
  %v95 = vsel %vm79, 1, 0
  %v96 = vsel %vm80, 1, 0
  %v97 = vsel %vm81, 1, 0
  %v98 = vsel %vm82, 1, 0
  %v99 = vsel %vm83, 1, 0
  %v100 = vsel %vm84, 1, 0
  %v101 = vsel %vm85, 1, 0
  %v102 = vsel %vm86, 1, 0
  %v103 = vsel %vm87, 1, 0
  %v104 = vsel %vm88, 1, 0
  %v105 = vsel %vm89, 1, 0
  %v106 = vsel %vm90, 1, 0
  %v107 = vsel %vm91, 1, 0
  %v108 = vsel %vm92, 1, 0
  %v109 = vcvt.s32.f32 %v93
  %v110 = vcvt.s32.f32 %v94
  %v111 = vcvt.s32.f32 %v95
  %v112 = vcvt.s32.f32 %v96
  %v113 = vcvt.s32.f32 %v97
  %v114 = vcvt.s32.f32 %v98
  %v115 = vcvt.s32.f32 %v99
  %v116 = vcvt.s32.f32 %v100
  %v117 = vcvt.s32.f32 %v101
  %v118 = vcvt.s32.f32 %v102
  %v119 = vcvt.s32.f32 %v103
  %v120 = vcvt.s32.f32 %v104
  %v121 = vcvt.s32.f32 %v105
  %v122 = vcvt.s32.f32 %v106
  %v123 = vcvt.s32.f32 %v107
  %v124 = vcvt.s32.f32 %v108
  %v125 = vld [vmem:[%s1] sm:$0xff]
  %v126 = vld [vmem:[%s1 + $0x8] sm:$0xff]
  %v127 = vld [vmem:[%s1 + $0x10] sm:$0xff]
  %v128 = vld [vmem:[%s1 + $0x18] sm:$0xff]
  %v129 = vld [vmem:[%s1 + $0x20] sm:$0xff]
  %v130 = vld [vmem:[%s1 + $0x28] sm:$0xff]
  %v131 = vld [vmem:[%s1 + $0x30] sm:$0xff]
  %v132 = vld [vmem:[%s1 + $0x38] sm:$0xff]
  %v133 = vld [vmem:[%s1 + $0x40] sm:$0xff]
  %v134 = vld [vmem:[%s1 + $0x48] sm:$0xff]
  %v135 = vld [vmem:[%s1 + $0x50] sm:$0xff]
  %v136 = vld [vmem:[%s1 + $0x58] sm:$0xff]
  %v137 = vld [vmem:[%s1 + $0x60] sm:$0xff]
  %v138 = vld [vmem:[%s1 + $0x68] sm:$0xff]
  %v139 = vld [vmem:[%s1 + $0x70] sm:$0xff]
  %v140 = vld [vmem:[%s1 + $0x78] sm:$0xff]
  %141 = vmatprep.subr.mxu0 0.0
  %v142 = vand.u32 %v125, 4294901760
  %143 = vmatpush1.msra.mxu0 %v142
  %144 = vmatprep.subr.mxu0 0.0
  %v145 = vand.u32 %v126, 4294901760
  %146 = vmatpush1.msra.mxu0 %v145
  %147 = vmatprep.subr.mxu0 0.0
  %v148 = vand.u32 %v127, 4294901760
  %149 = vmatpush1.msra.mxu0 %v148
  %150 = vmatprep.subr.mxu0 0.0
  %v151 = vand.u32 %v128, 4294901760
  %152 = vmatpush1.msra.mxu0 %v151
  %153 = vmatprep.subr.mxu0 0.0
  %v154 = vand.u32 %v129, 4294901760
  %155 = vmatpush1.msra.mxu0 %v154
  %156 = vmatprep.subr.mxu0 0.0
  %v157 = vand.u32 %v130, 4294901760
  %158 = vmatpush1.msra.mxu0 %v157
  %159 = vmatprep.subr.mxu0 0.0
  %v160 = vand.u32 %v131, 4294901760
  %161 = vmatpush1.msra.mxu0 %v160
  %162 = vmatprep.subr.mxu0 0.0
  %v163 = vand.u32 %v132, 4294901760
  %164 = vmatpush1.msra.mxu0 %v163
  %165 = vmatprep.subr.mxu0 0.0
  %v166 = vand.u32 %v133, 4294901760
  %167 = vmatpush1.msra.mxu0 %v166
  %168 = vmatprep.subr.mxu0 0.0
  %v169 = vand.u32 %v134, 4294901760
  %170 = vmatpush1.msra.mxu0 %v169
  %171 = vmatprep.subr.mxu0 0.0
  %v172 = vand.u32 %v135, 4294901760
  %173 = vmatpush1.msra.mxu0 %v172
  %174 = vmatprep.subr.mxu0 0.0
  %v175 = vand.u32 %v136, 4294901760
  %176 = vmatpush1.msra.mxu0 %v175
  %177 = vmatprep.subr.mxu0 0.0
  %v178 = vand.u32 %v137, 4294901760
  %179 = vmatpush1.msra.mxu0 %v178
  %180 = vmatprep.subr.mxu0 0.0
  %v181 = vand.u32 %v138, 4294901760
  %182 = vmatpush1.msra.mxu0 %v181
  %183 = vmatprep.subr.mxu0 0.0
  %v184 = vand.u32 %v139, 4294901760
  %185 = vmatpush1.msra.mxu0 %v184
  %186 = vmatprep.subr.mxu0 0.0
  %v187 = vand.u32 %v140, 4294901760
  %188 = vmatpush1.msra.mxu0 %v187
  %189 = vmatprep.subr.mxu0 0.0
  %190 = vmatpush1.msra.mxu0 0.0
  %191 = vmatprep.subr.mxu0 0.0
  %192 = vmatpush1.msra.mxu0 0.0
  %193 = vmatprep.subr.mxu0 0.0
  %194 = vmatpush1.msra.mxu0 0.0
  %195 = vmatprep.subr.mxu0 0.0
  %196 = vmatpush1.msra.mxu0 0.0
  %197 = vmatprep.subr.mxu0 0.0
  %198 = vmatpush1.msra.mxu0 0.0
  %199 = vmatprep.subr.mxu0 0.0
  %200 = vmatpush1.msra.mxu0 0.0
  %201 = vmatprep.subr.mxu0 0.0
  %202 = vmatpush1.msra.mxu0 0.0
  %203 = vmatprep.subr.mxu0 0.0
  %204 = vmatpush1.msra.mxu0 0.0
  %205 = vmatprep.subr.mxu0 0.0
  %206 = vmatpush1.msra.mxu0 0.0
  %207 = vmatprep.subr.mxu0 0.0
  %208 = vmatpush1.msra.mxu0 0.0
  %209 = vmatprep.subr.mxu0 0.0
  %210 = vmatpush1.msra.mxu0 0.0
  %211 = vmatprep.subr.mxu0 0.0
  %212 = vmatpush1.msra.mxu0 0.0
  %213 = vmatprep.subr.mxu0 0.0
  %214 = vmatpush1.msra.mxu0 0.0
  %215 = vmatprep.subr.mxu0 0.0
  %216 = vmatpush1.msra.mxu0 0.0
  %217 = vmatprep.subr.mxu0 0.0
  %218 = vmatpush1.msra.mxu0 0.0
  %219 = vmatprep.subr.mxu0 0.0
  %220 = vmatpush1.msra.mxu0 0.0
  %221 = vmatprep.mubr.f32.mxu0 0.0
  %v222 = vand.u32 %v109, 4294901760
  %v223 = vsub.f32 %v109, %v222
  %v224 = vand.u32 %v223, 4294901760
  %v225 = vsub.f32 %v223, %v224
  %v226 = vand.u32 %v225, 4294901760
  %227 = vmatmul.mubr.f32.gmra.mrb[0].mxu0 %v226
  %v228 = vpop.f32.mrb[0].mxu0
  %v229 = vadd.f32 0.0, %v228
  %v230 = vpop.f32.mrb[0].mxu0
  %231 = vmatprep.mubr.f32.mxu0 0.0
  %v232 = vand.u32 %v110, 4294901760
  %v233 = vsub.f32 %v110, %v232
  %v234 = vand.u32 %v233, 4294901760
  %v235 = vsub.f32 %v233, %v234
  %v236 = vand.u32 %v235, 4294901760
  %237 = vmatmul.mubr.f32.gmra.mrb[0].mxu0 %v236
  %v238 = vpop.f32.mrb[0].mxu0
  %v239 = vadd.f32 0.0, %v238
  %v240 = vpop.f32.mrb[0].mxu0
  %241 = vmatprep.mubr.f32.mxu0 0.0
  %v242 = vand.u32 %v111, 4294901760
  %v243 = vsub.f32 %v111, %v242
  %v244 = vand.u32 %v243, 4294901760
  %v245 = vsub.f32 %v243, %v244
  %v246 = vand.u32 %v245, 4294901760
  %247 = vmatmul.mubr.f32.gmra.mrb[0].mxu0 %v246
  %v248 = vpop.f32.mrb[0].mxu0
  %v249 = vadd.f32 0.0, %v248
  %v250 = vpop.f32.mrb[0].mxu0
  %251 = vmatprep.mubr.f32.mxu0 0.0
  %v252 = vand.u32 %v112, 4294901760
  %v253 = vsub.f32 %v112, %v252
  %v254 = vand.u32 %v253, 4294901760
  %v255 = vsub.f32 %v253, %v254
  %v256 = vand.u32 %v255, 4294901760
  %257 = vmatmul.mubr.f32.gmra.mrb[0].mxu0 %v256
  %v258 = vpop.f32.mrb[0].mxu0
  %v259 = vadd.f32 0.0, %v258
  %v260 = vpop.f32.mrb[0].mxu0
  %261 = vmatprep.mubr.f32.mxu0 0.0
  %v262 = vand.u32 %v113, 4294901760
  %v263 = vsub.f32 %v113, %v262
  %v264 = vand.u32 %v263, 4294901760
  %v265 = vsub.f32 %v263, %v264
  %v266 = vand.u32 %v265, 4294901760
  %267 = vmatmul.mubr.f32.gmra.mrb[0].mxu0 %v266
  %v268 = vpop.f32.mrb[0].mxu0
  %v269 = vadd.f32 0.0, %v268
  %v270 = vpop.f32.mrb[0].mxu0
  %271 = vmatprep.mubr.f32.mxu0 0.0
  %v272 = vand.u32 %v114, 4294901760
  %v273 = vsub.f32 %v114, %v272
  %v274 = vand.u32 %v273, 4294901760
  %v275 = vsub.f32 %v273, %v274
  %v276 = vand.u32 %v275, 4294901760
  %277 = vmatmul.mubr.f32.gmra.mrb[0].mxu0 %v276
  %v278 = vpop.f32.mrb[0].mxu0
  %v279 = vadd.f32 0.0, %v278
  %v280 = vpop.f32.mrb[0].mxu0
  %281 = vmatprep.mubr.f32.mxu0 0.0
  %v282 = vand.u32 %v115, 4294901760
  %v283 = vsub.f32 %v115, %v282
  %v284 = vand.u32 %v283, 4294901760
  %v285 = vsub.f32 %v283, %v284
  %v286 = vand.u32 %v285, 4294901760
  %287 = vmatmul.mubr.f32.gmra.mrb[0].mxu0 %v286
  %v288 = vpop.f32.mrb[0].mxu0
  %v289 = vadd.f32 0.0, %v288
  %v290 = vpop.f32.mrb[0].mxu0
  %291 = vmatprep.mubr.f32.mxu0 0.0
  %v292 = vand.u32 %v116, 4294901760
  %v293 = vsub.f32 %v116, %v292
  %v294 = vand.u32 %v293, 4294901760
  %v295 = vsub.f32 %v293, %v294
  %v296 = vand.u32 %v295, 4294901760
  %297 = vmatmul.mubr.f32.gmra.mrb[0].mxu0 %v296
  %v298 = vpop.f32.mrb[0].mxu0
  %v299 = vadd.f32 0.0, %v298
  %v300 = vpop.f32.mrb[0].mxu0
  %301 = vmatprep.mubr.f32.mxu0 0.0
  %v302 = vand.u32 %v117, 4294901760
  %v303 = vsub.f32 %v117, %v302
  %v304 = vand.u32 %v303, 4294901760
  %v305 = vsub.f32 %v303, %v304
  %v306 = vand.u32 %v305, 4294901760
  %307 = vmatmul.mubr.f32.gmra.mrb[0].mxu0 %v306
  %v308 = vpop.f32.mrb[0].mxu0
  %v309 = vadd.f32 0.0, %v308
  %v310 = vpop.f32.mrb[0].mxu0
  %311 = vmatprep.mubr.f32.mxu0 0.0
  %v312 = vand.u32 %v118, 4294901760
  %v313 = vsub.f32 %v118, %v312
  %v314 = vand.u32 %v313, 4294901760
  %v315 = vsub.f32 %v313, %v314
  %v316 = vand.u32 %v315, 4294901760
  %317 = vmatmul.mubr.f32.gmra.mrb[0].mxu0 %v316
  %v318 = vpop.f32.mrb[0].mxu0
  %v319 = vadd.f32 0.0, %v318
  %v320 = vpop.f32.mrb[0].mxu0
  %321 = vmatprep.mubr.f32.mxu0 0.0
  %v322 = vand.u32 %v119, 4294901760
  %v323 = vsub.f32 %v119, %v322
  %v324 = vand.u32 %v323, 4294901760
  %v325 = vsub.f32 %v323, %v324
  %v326 = vand.u32 %v325, 4294901760
  %327 = vmatmul.mubr.f32.gmra.mrb[0].mxu0 %v326
  %v328 = vpop.f32.mrb[0].mxu0
  %v329 = vadd.f32 0.0, %v328
  %v330 = vpop.f32.mrb[0].mxu0
  %331 = vmatprep.mubr.f32.mxu0 0.0
  %v332 = vand.u32 %v120, 4294901760
  %v333 = vsub.f32 %v120, %v332
  %v334 = vand.u32 %v333, 4294901760
  %v335 = vsub.f32 %v333, %v334
  %v336 = vand.u32 %v335, 4294901760
  %337 = vmatmul.mubr.f32.gmra.mrb[0].mxu0 %v336
  %v338 = vpop.f32.mrb[0].mxu0
  %v339 = vadd.f32 0.0, %v338
  %v340 = vpop.f32.mrb[0].mxu0
  %341 = vmatprep.mubr.f32.mxu0 0.0
  %v342 = vand.u32 %v121, 4294901760
  %v343 = vsub.f32 %v121, %v342
  %v344 = vand.u32 %v343, 4294901760
  %v345 = vsub.f32 %v343, %v344
  %v346 = vand.u32 %v345, 4294901760
  %347 = vmatmul.mubr.f32.gmra.mrb[0].mxu0 %v346
  %v348 = vpop.f32.mrb[0].mxu0
  %v349 = vadd.f32 0.0, %v348
  %v350 = vpop.f32.mrb[0].mxu0
  %351 = vmatprep.mubr.f32.mxu0 0.0
  %v352 = vand.u32 %v122, 4294901760
  %v353 = vsub.f32 %v122, %v352
  %v354 = vand.u32 %v353, 4294901760
  %v355 = vsub.f32 %v353, %v354
  %v356 = vand.u32 %v355, 4294901760
  %357 = vmatmul.mubr.f32.gmra.mrb[0].mxu0 %v356
  %v358 = vpop.f32.mrb[0].mxu0
  %v359 = vadd.f32 0.0, %v358
  %v360 = vpop.f32.mrb[0].mxu0
  %361 = vmatprep.mubr.f32.mxu0 0.0
  %v362 = vand.u32 %v123, 4294901760
  %v363 = vsub.f32 %v123, %v362
  %v364 = vand.u32 %v363, 4294901760
  %v365 = vsub.f32 %v363, %v364
  %v366 = vand.u32 %v365, 4294901760
  %367 = vmatmul.mubr.f32.gmra.mrb[0].mxu0 %v366
  %v368 = vpop.f32.mrb[0].mxu0
  %v369 = vadd.f32 0.0, %v368
  %v370 = vpop.f32.mrb[0].mxu0
  %371 = vmatprep.mubr.f32.mxu0 0.0
  %v372 = vand.u32 %v124, 4294901760
  %v373 = vsub.f32 %v124, %v372
  %v374 = vand.u32 %v373, 4294901760
  %v375 = vsub.f32 %v373, %v374
  %v376 = vand.u32 %v375, 4294901760
  %377 = vmatmul.mubr.f32.gmra.mrb[0].mxu0 %v376
  %v378 = vpop.f32.mrb[0].mxu0
  %v379 = vadd.f32 0.0, %v378
  %v380 = vpop.f32.mrb[0].mxu0
  %381 = vdwg.mxu0
  %382 = vmatprep.subr.mxu0 0.0
  %v383 = vand.u32 %v125, 4294901760
  %v384 = vsub.f32 %v125, %v383
  %v385 = vand.u32 %v384, 4294901760
  %v386 = vsub.f32 %v384, %v385
  %v387 = vand.u32 %v386, 4294901760
  %388 = vmatpush1.msra.mxu0 %v387
  %389 = vmatprep.subr.mxu0 0.0
  %v390 = vand.u32 %v126, 4294901760
  %v391 = vsub.f32 %v126, %v390
  %v392 = vand.u32 %v391, 4294901760
  %v393 = vsub.f32 %v391, %v392
  %v394 = vand.u32 %v393, 4294901760
  %395 = vmatpush1.msra.mxu0 %v394
  %396 = vmatprep.subr.mxu0 0.0
  %v397 = vand.u32 %v127, 4294901760
  %v398 = vsub.f32 %v127, %v397
  %v399 = vand.u32 %v398, 4294901760
  %v400 = vsub.f32 %v398, %v399
  %v401 = vand.u32 %v400, 4294901760
  %402 = vmatpush1.msra.mxu0 %v401
  %403 = vmatprep.subr.mxu0 0.0
  %v404 = vand.u32 %v128, 4294901760
  %v405 = vsub.f32 %v128, %v404
  %v406 = vand.u32 %v405, 4294901760
  %v407 = vsub.f32 %v405, %v406
  %v408 = vand.u32 %v407, 4294901760
  %409 = vmatpush1.msra.mxu0 %v408
  %410 = vmatprep.subr.mxu0 0.0
  %v411 = vand.u32 %v129, 4294901760
  %v412 = vsub.f32 %v129, %v411
  %v413 = vand.u32 %v412, 4294901760
  %v414 = vsub.f32 %v412, %v413
  %v415 = vand.u32 %v414, 4294901760
  %416 = vmatpush1.msra.mxu0 %v415
  %417 = vmatprep.subr.mxu0 0.0
  %v418 = vand.u32 %v130, 4294901760
  %v419 = vsub.f32 %v130, %v418
  %v420 = vand.u32 %v419, 4294901760
  %v421 = vsub.f32 %v419, %v420
  %v422 = vand.u32 %v421, 4294901760
  %423 = vmatpush1.msra.mxu0 %v422
  %424 = vmatprep.subr.mxu0 0.0
  %v425 = vand.u32 %v131, 4294901760
  %v426 = vsub.f32 %v131, %v425
  %v427 = vand.u32 %v426, 4294901760
  %v428 = vsub.f32 %v426, %v427
  %v429 = vand.u32 %v428, 4294901760
  %430 = vmatpush1.msra.mxu0 %v429
  %431 = vmatprep.subr.mxu0 0.0
  %v432 = vand.u32 %v132, 4294901760
  %v433 = vsub.f32 %v132, %v432
  %v434 = vand.u32 %v433, 4294901760
  %v435 = vsub.f32 %v433, %v434
  %v436 = vand.u32 %v435, 4294901760
  %437 = vmatpush1.msra.mxu0 %v436
  %438 = vmatprep.subr.mxu0 0.0
  %v439 = vand.u32 %v133, 4294901760
  %v440 = vsub.f32 %v133, %v439
  %v441 = vand.u32 %v440, 4294901760
  %v442 = vsub.f32 %v440, %v441
  %v443 = vand.u32 %v442, 4294901760
  %444 = vmatpush1.msra.mxu0 %v443
  %445 = vmatprep.subr.mxu0 0.0
  %v446 = vand.u32 %v134, 4294901760
  %v447 = vsub.f32 %v134, %v446
  %v448 = vand.u32 %v447, 4294901760
  %v449 = vsub.f32 %v447, %v448
  %v450 = vand.u32 %v449, 4294901760
  %451 = vmatpush1.msra.mxu0 %v450
  %452 = vmatprep.subr.mxu0 0.0
  %v453 = vand.u32 %v135, 4294901760
  %v454 = vsub.f32 %v135, %v453
  %v455 = vand.u32 %v454, 4294901760
  %v456 = vsub.f32 %v454, %v455
  %v457 = vand.u32 %v456, 4294901760
  %458 = vmatpush1.msra.mxu0 %v457
  %459 = vmatprep.subr.mxu0 0.0
  %v460 = vand.u32 %v136, 4294901760
  %v461 = vsub.f32 %v136, %v460
  %v462 = vand.u32 %v461, 4294901760
  %v463 = vsub.f32 %v461, %v462
  %v464 = vand.u32 %v463, 4294901760
  %465 = vmatpush1.msra.mxu0 %v464
  %466 = vmatprep.subr.mxu0 0.0
  %v467 = vand.u32 %v137, 4294901760
  %v468 = vsub.f32 %v137, %v467
  %v469 = vand.u32 %v468, 4294901760
  %v470 = vsub.f32 %v468, %v469
  %v471 = vand.u32 %v470, 4294901760
  %472 = vmatpush1.msra.mxu0 %v471
  %473 = vmatprep.subr.mxu0 0.0
  %v474 = vand.u32 %v138, 4294901760
  %v475 = vsub.f32 %v138, %v474
  %v476 = vand.u32 %v475, 4294901760
  %v477 = vsub.f32 %v475, %v476
  %v478 = vand.u32 %v477, 4294901760
  %479 = vmatpush1.msra.mxu0 %v478
  %480 = vmatprep.subr.mxu0 0.0
  %v481 = vand.u32 %v139, 4294901760
  %v482 = vsub.f32 %v139, %v481
  %v483 = vand.u32 %v482, 4294901760
  %v484 = vsub.f32 %v482, %v483
  %v485 = vand.u32 %v484, 4294901760
  %486 = vmatpush1.msra.mxu0 %v485
  %487 = vmatprep.subr.mxu0 0.0
  %v488 = vand.u32 %v140, 4294901760
  %v489 = vsub.f32 %v140, %v488
  %v490 = vand.u32 %v489, 4294901760
  %v491 = vsub.f32 %v489, %v490
  %v492 = vand.u32 %v491, 4294901760
  %493 = vmatpush1.msra.mxu0 %v492
  %494 = vmatprep.subr.mxu0 0.0
  %495 = vmatpush1.msra.mxu0 0.0
  %496 = vmatprep.subr.mxu0 0.0
  %497 = vmatpush1.msra.mxu0 0.0
  %498 = vmatprep.subr.mxu0 0.0
  %499 = vmatpush1.msra.mxu0 0.0
  %500 = vmatprep.subr.mxu0 0.0
  %501 = vmatpush1.msra.mxu0 0.0
  %502 = vmatprep.subr.mxu0 0.0
  %503 = vmatpush1.msra.mxu0 0.0
  %504 = vmatprep.subr.mxu0 0.0
  %505 = vmatpush1.msra.mxu0 0.0
  %506 = vmatprep.subr.mxu0 0.0
  %507 = vmatpush1.msra.mxu0 0.0
  %508 = vmatprep.subr.mxu0 0.0
  %509 = vmatpush1.msra.mxu0 0.0
  %510 = vmatprep.subr.mxu0 0.0
  %511 = vmatpush1.msra.mxu0 0.0
  %512 = vmatprep.subr.mxu0 0.0
  %513 = vmatpush1.msra.mxu0 0.0
  %514 = vmatprep.subr.mxu0 0.0
  %515 = vmatpush1.msra.mxu0 0.0
  %516 = vmatprep.subr.mxu0 0.0
  %517 = vmatpush1.msra.mxu0 0.0
  %518 = vmatprep.subr.mxu0 0.0
  %519 = vmatpush1.msra.mxu0 0.0
  %520 = vmatprep.subr.mxu0 0.0
  %521 = vmatpush1.msra.mxu0 0.0
  %522 = vmatprep.subr.mxu0 0.0
  %523 = vmatpush1.msra.mxu0 0.0
  %524 = vmatprep.subr.mxu0 0.0
  %525 = vmatpush1.msra.mxu0 0.0
  %526 = vmatprep.mubr.f32.mxu0 0.0
  %v527 = vand.u32 %v109, 4294901760
  %528 = vmatmul.mubr.f32.gmra.mrb[0].mxu0 %v527
  %v529 = vpop.f32.mrb[0].mxu0
  %v530 = vadd.f32 %v229, %v529
  %v531 = vpop.f32.mrb[0].mxu0
  %532 = vmatprep.mubr.f32.mxu0 0.0
  %v533 = vand.u32 %v110, 4294901760
  %534 = vmatmul.mubr.f32.gmra.mrb[0].mxu0 %v533
  %v535 = vpop.f32.mrb[0].mxu0
  %v536 = vadd.f32 %v239, %v535
  %v537 = vpop.f32.mrb[0].mxu0
  %538 = vmatprep.mubr.f32.mxu0 0.0
  %v539 = vand.u32 %v111, 4294901760
  %540 = vmatmul.mubr.f32.gmra.mrb[0].mxu0 %v539
  %v541 = vpop.f32.mrb[0].mxu0
  %v542 = vadd.f32 %v249, %v541
  %v543 = vpop.f32.mrb[0].mxu0
  %544 = vmatprep.mubr.f32.mxu0 0.0
  %v545 = vand.u32 %v112, 4294901760
  %546 = vmatmul.mubr.f32.gmra.mrb[0].mxu0 %v545
  %v547 = vpop.f32.mrb[0].mxu0
  %v548 = vadd.f32 %v259, %v547
  %v549 = vpop.f32.mrb[0].mxu0
  %550 = vmatprep.mubr.f32.mxu0 0.0
  %v551 = vand.u32 %v113, 4294901760
  %552 = vmatmul.mubr.f32.gmra.mrb[0].mxu0 %v551
  %v553 = vpop.f32.mrb[0].mxu0
  %v554 = vadd.f32 %v269, %v553
  %v555 = vpop.f32.mrb[0].mxu0
  %556 = vmatprep.mubr.f32.mxu0 0.0
  %v557 = vand.u32 %v114, 4294901760
  %558 = vmatmul.mubr.f32.gmra.mrb[0].mxu0 %v557
  %v559 = vpop.f32.mrb[0].mxu0
  %v560 = vadd.f32 %v279, %v559
  %v561 = vpop.f32.mrb[0].mxu0
  %562 = vmatprep.mubr.f32.mxu0 0.0
  %v563 = vand.u32 %v115, 4294901760
  %564 = vmatmul.mubr.f32.gmra.mrb[0].mxu0 %v563
  %v565 = vpop.f32.mrb[0].mxu0
  %v566 = vadd.f32 %v289, %v565
  %v567 = vpop.f32.mrb[0].mxu0
  %568 = vmatprep.mubr.f32.mxu0 0.0
  %v569 = vand.u32 %v116, 4294901760
  %570 = vmatmul.mubr.f32.gmra.mrb[0].mxu0 %v569
  %v571 = vpop.f32.mrb[0].mxu0
  %v572 = vadd.f32 %v299, %v571
  %v573 = vpop.f32.mrb[0].mxu0
  %574 = vmatprep.mubr.f32.mxu0 0.0
  %v575 = vand.u32 %v117, 4294901760
  %576 = vmatmul.mubr.f32.gmra.mrb[0].mxu0 %v575
  %v577 = vpop.f32.mrb[0].mxu0
  %v578 = vadd.f32 %v309, %v577
  %v579 = vpop.f32.mrb[0].mxu0
  %580 = vmatprep.mubr.f32.mxu0 0.0
  %v581 = vand.u32 %v118, 4294901760
  %582 = vmatmul.mubr.f32.gmra.mrb[0].mxu0 %v581
  %v583 = vpop.f32.mrb[0].mxu0
  %v584 = vadd.f32 %v319, %v583
  %v585 = vpop.f32.mrb[0].mxu0
  %586 = vmatprep.mubr.f32.mxu0 0.0
  %v587 = vand.u32 %v119, 4294901760
  %588 = vmatmul.mubr.f32.gmra.mrb[0].mxu0 %v587
  %v589 = vpop.f32.mrb[0].mxu0
  %v590 = vadd.f32 %v329, %v589
  %v591 = vpop.f32.mrb[0].mxu0
  %592 = vmatprep.mubr.f32.mxu0 0.0
  %v593 = vand.u32 %v120, 4294901760
  %594 = vmatmul.mubr.f32.gmra.mrb[0].mxu0 %v593
  %v595 = vpop.f32.mrb[0].mxu0
  %v596 = vadd.f32 %v339, %v595
  %v597 = vpop.f32.mrb[0].mxu0
  %598 = vmatprep.mubr.f32.mxu0 0.0
  %v599 = vand.u32 %v121, 4294901760
  %600 = vmatmul.mubr.f32.gmra.mrb[0].mxu0 %v599
  %v601 = vpop.f32.mrb[0].mxu0
  %v602 = vadd.f32 %v349, %v601
  %v603 = vpop.f32.mrb[0].mxu0
  %604 = vmatprep.mubr.f32.mxu0 0.0
  %v605 = vand.u32 %v122, 4294901760
  %606 = vmatmul.mubr.f32.gmra.mrb[0].mxu0 %v605
  %v607 = vpop.f32.mrb[0].mxu0
  %v608 = vadd.f32 %v359, %v607
  %v609 = vpop.f32.mrb[0].mxu0
  %610 = vmatprep.mubr.f32.mxu0 0.0
  %v611 = vand.u32 %v123, 4294901760
  %612 = vmatmul.mubr.f32.gmra.mrb[0].mxu0 %v611
  %v613 = vpop.f32.mrb[0].mxu0
  %v614 = vadd.f32 %v369, %v613
  %v615 = vpop.f32.mrb[0].mxu0
  %616 = vmatprep.mubr.f32.mxu0 0.0
  %v617 = vand.u32 %v124, 4294901760
  %618 = vmatmul.mubr.f32.gmra.mrb[0].mxu0 %v617
  %v619 = vpop.f32.mrb[0].mxu0
  %v620 = vadd.f32 %v379, %v619
  %v621 = vpop.f32.mrb[0].mxu0
  %622 = vdwg.mxu0
  %623 = vmatprep.subr.mxu0 0.0
  %v624 = vand.u32 %v125, 4294901760
  %v625 = vsub.f32 %v125, %v624
  %626 = vmatpush1.msra.mxu0 %v625
  %627 = vmatprep.subr.mxu0 0.0
  %v628 = vand.u32 %v126, 4294901760
  %v629 = vsub.f32 %v126, %v628
  %630 = vmatpush1.msra.mxu0 %v629
  %631 = vmatprep.subr.mxu0 0.0
  %v632 = vand.u32 %v127, 4294901760
  %v633 = vsub.f32 %v127, %v632
  %634 = vmatpush1.msra.mxu0 %v633
  %635 = vmatprep.subr.mxu0 0.0
  %v636 = vand.u32 %v128, 4294901760
  %v637 = vsub.f32 %v128, %v636
  %638 = vmatpush1.msra.mxu0 %v637
  %639 = vmatprep.subr.mxu0 0.0
  %v640 = vand.u32 %v129, 4294901760
  %v641 = vsub.f32 %v129, %v640
  %642 = vmatpush1.msra.mxu0 %v641
  %643 = vmatprep.subr.mxu0 0.0
  %v644 = vand.u32 %v130, 4294901760
  %v645 = vsub.f32 %v130, %v644
  %646 = vmatpush1.msra.mxu0 %v645
  %647 = vmatprep.subr.mxu0 0.0
  %v648 = vand.u32 %v131, 4294901760
  %v649 = vsub.f32 %v131, %v648
  %650 = vmatpush1.msra.mxu0 %v649
  %651 = vmatprep.subr.mxu0 0.0
  %v652 = vand.u32 %v132, 4294901760
  %v653 = vsub.f32 %v132, %v652
  %654 = vmatpush1.msra.mxu0 %v653
  %655 = vmatprep.subr.mxu0 0.0
  %v656 = vand.u32 %v133, 4294901760
  %v657 = vsub.f32 %v133, %v656
  %658 = vmatpush1.msra.mxu0 %v657
  %659 = vmatprep.subr.mxu0 0.0
  %v660 = vand.u32 %v134, 4294901760
  %v661 = vsub.f32 %v134, %v660
  %662 = vmatpush1.msra.mxu0 %v661
  %663 = vmatprep.subr.mxu0 0.0
  %v664 = vand.u32 %v135, 4294901760
  %v665 = vsub.f32 %v135, %v664
  %666 = vmatpush1.msra.mxu0 %v665
  %667 = vmatprep.subr.mxu0 0.0
  %v668 = vand.u32 %v136, 4294901760
  %v669 = vsub.f32 %v136, %v668
  %670 = vmatpush1.msra.mxu0 %v669
  %671 = vmatprep.subr.mxu0 0.0
  %v672 = vand.u32 %v137, 4294901760
  %v673 = vsub.f32 %v137, %v672
  %674 = vmatpush1.msra.mxu0 %v673
  %675 = vmatprep.subr.mxu0 0.0
  %v676 = vand.u32 %v138, 4294901760
  %v677 = vsub.f32 %v138, %v676
  %678 = vmatpush1.msra.mxu0 %v677
  %679 = vmatprep.subr.mxu0 0.0
  %v680 = vand.u32 %v139, 4294901760
  %v681 = vsub.f32 %v139, %v680
  %682 = vmatpush1.msra.mxu0 %v681
  %683 = vmatprep.subr.mxu0 0.0
  %v684 = vand.u32 %v140, 4294901760
  %v685 = vsub.f32 %v140, %v684
  %686 = vmatpush1.msra.mxu0 %v685
  %687 = vmatprep.subr.mxu0 0.0
  %688 = vmatpush1.msra.mxu0 0.0
  %689 = vmatprep.subr.mxu0 0.0
  %690 = vmatpush1.msra.mxu0 0.0
  %691 = vmatprep.subr.mxu0 0.0
  %692 = vmatpush1.msra.mxu0 0.0
  %693 = vmatprep.subr.mxu0 0.0
  %694 = vmatpush1.msra.mxu0 0.0
  %695 = vmatprep.subr.mxu0 0.0
  %696 = vmatpush1.msra.mxu0 0.0
  %697 = vmatprep.subr.mxu0 0.0
  %698 = vmatpush1.msra.mxu0 0.0
  %699 = vmatprep.subr.mxu0 0.0
  %700 = vmatpush1.msra.mxu0 0.0
  %701 = vmatprep.subr.mxu0 0.0
  %702 = vmatpush1.msra.mxu0 0.0
  %703 = vmatprep.subr.mxu0 0.0
  %704 = vmatpush1.msra.mxu0 0.0
  %705 = vmatprep.subr.mxu0 0.0
  %706 = vmatpush1.msra.mxu0 0.0
  %707 = vmatprep.subr.mxu0 0.0
  %708 = vmatpush1.msra.mxu0 0.0
  %709 = vmatprep.subr.mxu0 0.0
  %710 = vmatpush1.msra.mxu0 0.0
  %711 = vmatprep.subr.mxu0 0.0
  %712 = vmatpush1.msra.mxu0 0.0
  %713 = vmatprep.subr.mxu0 0.0
  %714 = vmatpush1.msra.mxu0 0.0
  %715 = vmatprep.subr.mxu0 0.0
  %716 = vmatpush1.msra.mxu0 0.0
  %717 = vmatprep.subr.mxu0 0.0
  %718 = vmatpush1.msra.mxu0 0.0
  %719 = vmatprep.mubr.f32.mxu0 0.0
  %v720 = vand.u32 %v109, 4294901760
  %v721 = vsub.f32 %v109, %v720
  %722 = vmatmul.mubr.f32.gmra.mrb[0].mxu0 %v721
  %v723 = vpop.f32.mrb[0].mxu0
  %v724 = vadd.f32 %v530, %v723
  %v725 = vpop.f32.mrb[0].mxu0
  %726 = vmatprep.mubr.f32.mxu0 0.0
  %v727 = vand.u32 %v110, 4294901760
  %v728 = vsub.f32 %v110, %v727
  %729 = vmatmul.mubr.f32.gmra.mrb[0].mxu0 %v728
  %v730 = vpop.f32.mrb[0].mxu0
  %v731 = vadd.f32 %v536, %v730
  %v732 = vpop.f32.mrb[0].mxu0
  %733 = vmatprep.mubr.f32.mxu0 0.0
  %v734 = vand.u32 %v111, 4294901760
  %v735 = vsub.f32 %v111, %v734
  %736 = vmatmul.mubr.f32.gmra.mrb[0].mxu0 %v735
  %v737 = vpop.f32.mrb[0].mxu0
  %v738 = vadd.f32 %v542, %v737
  %v739 = vpop.f32.mrb[0].mxu0
  %740 = vmatprep.mubr.f32.mxu0 0.0
  %v741 = vand.u32 %v112, 4294901760
  %v742 = vsub.f32 %v112, %v741
  %743 = vmatmul.mubr.f32.gmra.mrb[0].mxu0 %v742
  %v744 = vpop.f32.mrb[0].mxu0
  %v745 = vadd.f32 %v548, %v744
  %v746 = vpop.f32.mrb[0].mxu0
  %747 = vmatprep.mubr.f32.mxu0 0.0
  %v748 = vand.u32 %v113, 4294901760
  %v749 = vsub.f32 %v113, %v748
  %750 = vmatmul.mubr.f32.gmra.mrb[0].mxu0 %v749
  %v751 = vpop.f32.mrb[0].mxu0
  %v752 = vadd.f32 %v554, %v751
  %v753 = vpop.f32.mrb[0].mxu0
  %754 = vmatprep.mubr.f32.mxu0 0.0
  %v755 = vand.u32 %v114, 4294901760
  %v756 = vsub.f32 %v114, %v755
  %757 = vmatmul.mubr.f32.gmra.mrb[0].mxu0 %v756
  %v758 = vpop.f32.mrb[0].mxu0
  %v759 = vadd.f32 %v560, %v758
  %v760 = vpop.f32.mrb[0].mxu0
  %761 = vmatprep.mubr.f32.mxu0 0.0
  %v762 = vand.u32 %v115, 4294901760
  %v763 = vsub.f32 %v115, %v762
  %764 = vmatmul.mubr.f32.gmra.mrb[0].mxu0 %v763
  %v765 = vpop.f32.mrb[0].mxu0
  %v766 = vadd.f32 %v566, %v765
  %v767 = vpop.f32.mrb[0].mxu0
  %768 = vmatprep.mubr.f32.mxu0 0.0
  %v769 = vand.u32 %v116, 4294901760
  %v770 = vsub.f32 %v116, %v769
  %771 = vmatmul.mubr.f32.gmra.mrb[0].mxu0 %v770
  %v772 = vpop.f32.mrb[0].mxu0
  %v773 = vadd.f32 %v572, %v772
  %v774 = vpop.f32.mrb[0].mxu0
  %775 = vmatprep.mubr.f32.mxu0 0.0
  %v776 = vand.u32 %v117, 4294901760
  %v777 = vsub.f32 %v117, %v776
  %778 = vmatmul.mubr.f32.gmra.mrb[0].mxu0 %v777
  %v779 = vpop.f32.mrb[0].mxu0
  %v780 = vadd.f32 %v578, %v779
  %v781 = vpop.f32.mrb[0].mxu0
  %782 = vmatprep.mubr.f32.mxu0 0.0
  %v783 = vand.u32 %v118, 4294901760
  %v784 = vsub.f32 %v118, %v783
  %785 = vmatmul.mubr.f32.gmra.mrb[0].mxu0 %v784
  %v786 = vpop.f32.mrb[0].mxu0
  %v787 = vadd.f32 %v584, %v786
  %v788 = vpop.f32.mrb[0].mxu0
  %789 = vmatprep.mubr.f32.mxu0 0.0
  %v790 = vand.u32 %v119, 4294901760
  %v791 = vsub.f32 %v119, %v790
  %792 = vmatmul.mubr.f32.gmra.mrb[0].mxu0 %v791
  %v793 = vpop.f32.mrb[0].mxu0
  %v794 = vadd.f32 %v590, %v793
  %v795 = vpop.f32.mrb[0].mxu0
  %796 = vmatprep.mubr.f32.mxu0 0.0
  %v797 = vand.u32 %v120, 4294901760
  %v798 = vsub.f32 %v120, %v797
  %799 = vmatmul.mubr.f32.gmra.mrb[0].mxu0 %v798
  %v800 = vpop.f32.mrb[0].mxu0
  %v801 = vadd.f32 %v596, %v800
  %v802 = vpop.f32.mrb[0].mxu0
  %803 = vmatprep.mubr.f32.mxu0 0.0
  %v804 = vand.u32 %v121, 4294901760
  %v805 = vsub.f32 %v121, %v804
  %806 = vmatmul.mubr.f32.gmra.mrb[0].mxu0 %v805
  %v807 = vpop.f32.mrb[0].mxu0
  %v808 = vadd.f32 %v602, %v807
  %v809 = vpop.f32.mrb[0].mxu0
  %810 = vmatprep.mubr.f32.mxu0 0.0
  %v811 = vand.u32 %v122, 4294901760
  %v812 = vsub.f32 %v122, %v811
  %813 = vmatmul.mubr.f32.gmra.mrb[0].mxu0 %v812
  %v814 = vpop.f32.mrb[0].mxu0
  %v815 = vadd.f32 %v608, %v814
  %v816 = vpop.f32.mrb[0].mxu0
  %817 = vmatprep.mubr.f32.mxu0 0.0
  %v818 = vand.u32 %v123, 4294901760
  %v819 = vsub.f32 %v123, %v818
  %820 = vmatmul.mubr.f32.gmra.mrb[0].mxu0 %v819
  %v821 = vpop.f32.mrb[0].mxu0
  %v822 = vadd.f32 %v614, %v821
  %v823 = vpop.f32.mrb[0].mxu0
  %824 = vmatprep.mubr.f32.mxu0 0.0
  %v825 = vand.u32 %v124, 4294901760
  %v826 = vsub.f32 %v124, %v825
  %827 = vmatmul.mubr.f32.gmra.mrb[0].mxu0 %v826
  %v828 = vpop.f32.mrb[0].mxu0
  %v829 = vadd.f32 %v620, %v828
  %v830 = vpop.f32.mrb[0].mxu0
  %831 = vdwg.mxu0
  %832 = vmatprep.subr.mxu0 0.0
  %v833 = vand.u32 %v125, 4294901760
  %834 = vmatpush1.msra.mxu0 %v833
  %835 = vmatprep.subr.mxu0 0.0
  %v836 = vand.u32 %v126, 4294901760
  %837 = vmatpush1.msra.mxu0 %v836
  %838 = vmatprep.subr.mxu0 0.0
  %v839 = vand.u32 %v127, 4294901760
  %840 = vmatpush1.msra.mxu0 %v839
  %841 = vmatprep.subr.mxu0 0.0
  %v842 = vand.u32 %v128, 4294901760
  %843 = vmatpush1.msra.mxu0 %v842
  %844 = vmatprep.subr.mxu0 0.0
  %v845 = vand.u32 %v129, 4294901760
  %846 = vmatpush1.msra.mxu0 %v845
  %847 = vmatprep.subr.mxu0 0.0
  %v848 = vand.u32 %v130, 4294901760
  %849 = vmatpush1.msra.mxu0 %v848
  %850 = vmatprep.subr.mxu0 0.0
  %v851 = vand.u32 %v131, 4294901760
  %852 = vmatpush1.msra.mxu0 %v851
  %853 = vmatprep.subr.mxu0 0.0
  %v854 = vand.u32 %v132, 4294901760
  %855 = vmatpush1.msra.mxu0 %v854
  %856 = vmatprep.subr.mxu0 0.0
  %v857 = vand.u32 %v133, 4294901760
  %858 = vmatpush1.msra.mxu0 %v857
  %859 = vmatprep.subr.mxu0 0.0
  %v860 = vand.u32 %v134, 4294901760
  %861 = vmatpush1.msra.mxu0 %v860
  %862 = vmatprep.subr.mxu0 0.0
  %v863 = vand.u32 %v135, 4294901760
  %864 = vmatpush1.msra.mxu0 %v863
  %865 = vmatprep.subr.mxu0 0.0
  %v866 = vand.u32 %v136, 4294901760
  %867 = vmatpush1.msra.mxu0 %v866
  %868 = vmatprep.subr.mxu0 0.0
  %v869 = vand.u32 %v137, 4294901760
  %870 = vmatpush1.msra.mxu0 %v869
  %871 = vmatprep.subr.mxu0 0.0
  %v872 = vand.u32 %v138, 4294901760
  %873 = vmatpush1.msra.mxu0 %v872
  %874 = vmatprep.subr.mxu0 0.0
  %v875 = vand.u32 %v139, 4294901760
  %876 = vmatpush1.msra.mxu0 %v875
  %877 = vmatprep.subr.mxu0 0.0
  %v878 = vand.u32 %v140, 4294901760
  %879 = vmatpush1.msra.mxu0 %v878
  %880 = vmatprep.subr.mxu0 0.0
  %881 = vmatpush1.msra.mxu0 0.0
  %882 = vmatprep.subr.mxu0 0.0
  %883 = vmatpush1.msra.mxu0 0.0
  %884 = vmatprep.subr.mxu0 0.0
  %885 = vmatpush1.msra.mxu0 0.0
  %886 = vmatprep.subr.mxu0 0.0
  %887 = vmatpush1.msra.mxu0 0.0
  %888 = vmatprep.subr.mxu0 0.0
  %889 = vmatpush1.msra.mxu0 0.0
  %890 = vmatprep.subr.mxu0 0.0
  %891 = vmatpush1.msra.mxu0 0.0
  %892 = vmatprep.subr.mxu0 0.0
  %893 = vmatpush1.msra.mxu0 0.0
  %894 = vmatprep.subr.mxu0 0.0
  %895 = vmatpush1.msra.mxu0 0.0
  %896 = vmatprep.subr.mxu0 0.0
  %897 = vmatpush1.msra.mxu0 0.0
  %898 = vmatprep.subr.mxu0 0.0
  %899 = vmatpush1.msra.mxu0 0.0
  %900 = vmatprep.subr.mxu0 0.0
  %901 = vmatpush1.msra.mxu0 0.0
  %902 = vmatprep.subr.mxu0 0.0
  %903 = vmatpush1.msra.mxu0 0.0
  %904 = vmatprep.subr.mxu0 0.0
  %905 = vmatpush1.msra.mxu0 0.0
  %906 = vmatprep.subr.mxu0 0.0
  %907 = vmatpush1.msra.mxu0 0.0
  %908 = vmatprep.subr.mxu0 0.0
  %909 = vmatpush1.msra.mxu0 0.0
  %910 = vmatprep.subr.mxu0 0.0
  %911 = vmatpush1.msra.mxu0 0.0
  %912 = vmatprep.mubr.f32.mxu0 0.0
  %v913 = vand.u32 %v109, 4294901760
  %v914 = vsub.f32 %v109, %v913
  %v915 = vand.u32 %v914, 4294901760
  %916 = vmatmul.mubr.f32.gmra.mrb[0].mxu0 %v915
  %v917 = vpop.f32.mrb[0].mxu0
  %v918 = vadd.f32 %v724, %v917
  %v919 = vpop.f32.mrb[0].mxu0
  %920 = vmatprep.mubr.f32.mxu0 0.0
  %v921 = vand.u32 %v110, 4294901760
  %v922 = vsub.f32 %v110, %v921
  %v923 = vand.u32 %v922, 4294901760
  %924 = vmatmul.mubr.f32.gmra.mrb[0].mxu0 %v923
  %v925 = vpop.f32.mrb[0].mxu0
  %v926 = vadd.f32 %v731, %v925
  %v927 = vpop.f32.mrb[0].mxu0
  %928 = vmatprep.mubr.f32.mxu0 0.0
  %v929 = vand.u32 %v111, 4294901760
  %v930 = vsub.f32 %v111, %v929
  %v931 = vand.u32 %v930, 4294901760
  %932 = vmatmul.mubr.f32.gmra.mrb[0].mxu0 %v931
  %v933 = vpop.f32.mrb[0].mxu0
  %v934 = vadd.f32 %v738, %v933
  %v935 = vpop.f32.mrb[0].mxu0
  %936 = vmatprep.mubr.f32.mxu0 0.0
  %v937 = vand.u32 %v112, 4294901760
  %v938 = vsub.f32 %v112, %v937
  %v939 = vand.u32 %v938, 4294901760
  %940 = vmatmul.mubr.f32.gmra.mrb[0].mxu0 %v939
  %v941 = vpop.f32.mrb[0].mxu0
  %v942 = vadd.f32 %v745, %v941
  %v943 = vpop.f32.mrb[0].mxu0
  %944 = vmatprep.mubr.f32.mxu0 0.0
  %v945 = vand.u32 %v113, 4294901760
  %v946 = vsub.f32 %v113, %v945
  %v947 = vand.u32 %v946, 4294901760
  %948 = vmatmul.mubr.f32.gmra.mrb[0].mxu0 %v947
  %v949 = vpop.f32.mrb[0].mxu0
  %v950 = vadd.f32 %v752, %v949
  %v951 = vpop.f32.mrb[0].mxu0
  %952 = vmatprep.mubr.f32.mxu0 0.0
  %v953 = vand.u32 %v114, 4294901760
  %v954 = vsub.f32 %v114, %v953
  %v955 = vand.u32 %v954, 4294901760
  %956 = vmatmul.mubr.f32.gmra.mrb[0].mxu0 %v955
  %v957 = vpop.f32.mrb[0].mxu0
  %v958 = vadd.f32 %v759, %v957
  %v959 = vpop.f32.mrb[0].mxu0
  %960 = vmatprep.mubr.f32.mxu0 0.0
  %v961 = vand.u32 %v115, 4294901760
  %v962 = vsub.f32 %v115, %v961
  %v963 = vand.u32 %v962, 4294901760
  %964 = vmatmul.mubr.f32.gmra.mrb[0].mxu0 %v963
  %v965 = vpop.f32.mrb[0].mxu0
  %v966 = vadd.f32 %v766, %v965
  %v967 = vpop.f32.mrb[0].mxu0
  %968 = vmatprep.mubr.f32.mxu0 0.0
  %v969 = vand.u32 %v116, 4294901760
  %v970 = vsub.f32 %v116, %v969
  %v971 = vand.u32 %v970, 4294901760
  %972 = vmatmul.mubr.f32.gmra.mrb[0].mxu0 %v971
  %v973 = vpop.f32.mrb[0].mxu0
  %v974 = vadd.f32 %v773, %v973
  %v975 = vpop.f32.mrb[0].mxu0
  %976 = vmatprep.mubr.f32.mxu0 0.0
  %v977 = vand.u32 %v117, 4294901760
  %v978 = vsub.f32 %v117, %v977
  %v979 = vand.u32 %v978, 4294901760
  %980 = vmatmul.mubr.f32.gmra.mrb[0].mxu0 %v979
  %v981 = vpop.f32.mrb[0].mxu0
  %v982 = vadd.f32 %v780, %v981
  %v983 = vpop.f32.mrb[0].mxu0
  %984 = vmatprep.mubr.f32.mxu0 0.0
  %v985 = vand.u32 %v118, 4294901760
  %v986 = vsub.f32 %v118, %v985
  %v987 = vand.u32 %v986, 4294901760
  %988 = vmatmul.mubr.f32.gmra.mrb[0].mxu0 %v987
  %v989 = vpop.f32.mrb[0].mxu0
  %v990 = vadd.f32 %v787, %v989
  %v991 = vpop.f32.mrb[0].mxu0
  %992 = vmatprep.mubr.f32.mxu0 0.0
  %v993 = vand.u32 %v119, 4294901760
  %v994 = vsub.f32 %v119, %v993
  %v995 = vand.u32 %v994, 4294901760
  %996 = vmatmul.mubr.f32.gmra.mrb[0].mxu0 %v995
  %v997 = vpop.f32.mrb[0].mxu0
  %v998 = vadd.f32 %v794, %v997
  %v999 = vpop.f32.mrb[0].mxu0
  %1000 = vmatprep.mubr.f32.mxu0 0.0
  %v1001 = vand.u32 %v120, 4294901760
  %v1002 = vsub.f32 %v120, %v1001
  %v1003 = vand.u32 %v1002, 4294901760
  %1004 = vmatmul.mubr.f32.gmra.mrb[0].mxu0 %v1003
  %v1005 = vpop.f32.mrb[0].mxu0
  %v1006 = vadd.f32 %v801, %v1005
  %v1007 = vpop.f32.mrb[0].mxu0
  %1008 = vmatprep.mubr.f32.mxu0 0.0
  %v1009 = vand.u32 %v121, 4294901760
  %v1010 = vsub.f32 %v121, %v1009
  %v1011 = vand.u32 %v1010, 4294901760
  %1012 = vmatmul.mubr.f32.gmra.mrb[0].mxu0 %v1011
  %v1013 = vpop.f32.mrb[0].mxu0
  %v1014 = vadd.f32 %v808, %v1013
  %v1015 = vpop.f32.mrb[0].mxu0
  %1016 = vmatprep.mubr.f32.mxu0 0.0
  %v1017 = vand.u32 %v122, 4294901760
  %v1018 = vsub.f32 %v122, %v1017
  %v1019 = vand.u32 %v1018, 4294901760
  %1020 = vmatmul.mubr.f32.gmra.mrb[0].mxu0 %v1019
  %v1021 = vpop.f32.mrb[0].mxu0
  %v1022 = vadd.f32 %v815, %v1021
  %v1023 = vpop.f32.mrb[0].mxu0
  %1024 = vmatprep.mubr.f32.mxu0 0.0
  %v1025 = vand.u32 %v123, 4294901760
  %v1026 = vsub.f32 %v123, %v1025
  %v1027 = vand.u32 %v1026, 4294901760
  %1028 = vmatmul.mubr.f32.gmra.mrb[0].mxu0 %v1027
  %v1029 = vpop.f32.mrb[0].mxu0
  %v1030 = vadd.f32 %v822, %v1029
  %v1031 = vpop.f32.mrb[0].mxu0
  %1032 = vmatprep.mubr.f32.mxu0 0.0
  %v1033 = vand.u32 %v124, 4294901760
  %v1034 = vsub.f32 %v124, %v1033
  %v1035 = vand.u32 %v1034, 4294901760
  %1036 = vmatmul.mubr.f32.gmra.mrb[0].mxu0 %v1035
  %v1037 = vpop.f32.mrb[0].mxu0
  %v1038 = vadd.f32 %v829, %v1037
  %v1039 = vpop.f32.mrb[0].mxu0
  %1040 = vdwg.mxu0
  %1041 = vmatprep.subr.mxu0 0.0
  %v1042 = vand.u32 %v125, 4294901760
  %v1043 = vsub.f32 %v125, %v1042
  %v1044 = vand.u32 %v1043, 4294901760
  %1045 = vmatpush1.msra.mxu0 %v1044
  %1046 = vmatprep.subr.mxu0 0.0
  %v1047 = vand.u32 %v126, 4294901760
  %v1048 = vsub.f32 %v126, %v1047
  %v1049 = vand.u32 %v1048, 4294901760
  %1050 = vmatpush1.msra.mxu0 %v1049
  %1051 = vmatprep.subr.mxu0 0.0
  %v1052 = vand.u32 %v127, 4294901760
  %v1053 = vsub.f32 %v127, %v1052
  %v1054 = vand.u32 %v1053, 4294901760
  %1055 = vmatpush1.msra.mxu0 %v1054
  %1056 = vmatprep.subr.mxu0 0.0
  %v1057 = vand.u32 %v128, 4294901760
  %v1058 = vsub.f32 %v128, %v1057
  %v1059 = vand.u32 %v1058, 4294901760
  %1060 = vmatpush1.msra.mxu0 %v1059
  %1061 = vmatprep.subr.mxu0 0.0
  %v1062 = vand.u32 %v129, 4294901760
  %v1063 = vsub.f32 %v129, %v1062
  %v1064 = vand.u32 %v1063, 4294901760
  %1065 = vmatpush1.msra.mxu0 %v1064
  %1066 = vmatprep.subr.mxu0 0.0
  %v1067 = vand.u32 %v130, 4294901760
  %v1068 = vsub.f32 %v130, %v1067
  %v1069 = vand.u32 %v1068, 4294901760
  %1070 = vmatpush1.msra.mxu0 %v1069
  %1071 = vmatprep.subr.mxu0 0.0
  %v1072 = vand.u32 %v131, 4294901760
  %v1073 = vsub.f32 %v131, %v1072
  %v1074 = vand.u32 %v1073, 4294901760
  %1075 = vmatpush1.msra.mxu0 %v1074
  %1076 = vmatprep.subr.mxu0 0.0
  %v1077 = vand.u32 %v132, 4294901760
  %v1078 = vsub.f32 %v132, %v1077
  %v1079 = vand.u32 %v1078, 4294901760
  %1080 = vmatpush1.msra.mxu0 %v1079
  %1081 = vmatprep.subr.mxu0 0.0
  %v1082 = vand.u32 %v133, 4294901760
  %v1083 = vsub.f32 %v133, %v1082
  %v1084 = vand.u32 %v1083, 4294901760
  %1085 = vmatpush1.msra.mxu0 %v1084
  %1086 = vmatprep.subr.mxu0 0.0
  %v1087 = vand.u32 %v134, 4294901760
  %v1088 = vsub.f32 %v134, %v1087
  %v1089 = vand.u32 %v1088, 4294901760
  %1090 = vmatpush1.msra.mxu0 %v1089
  %1091 = vmatprep.subr.mxu0 0.0
  %v1092 = vand.u32 %v135, 4294901760
  %v1093 = vsub.f32 %v135, %v1092
  %v1094 = vand.u32 %v1093, 4294901760
  %1095 = vmatpush1.msra.mxu0 %v1094
  %1096 = vmatprep.subr.mxu0 0.0
  %v1097 = vand.u32 %v136, 4294901760
  %v1098 = vsub.f32 %v136, %v1097
  %v1099 = vand.u32 %v1098, 4294901760
  %1100 = vmatpush1.msra.mxu0 %v1099
  %1101 = vmatprep.subr.mxu0 0.0
  %v1102 = vand.u32 %v137, 4294901760
  %v1103 = vsub.f32 %v137, %v1102
  %v1104 = vand.u32 %v1103, 4294901760
  %1105 = vmatpush1.msra.mxu0 %v1104
  %1106 = vmatprep.subr.mxu0 0.0
  %v1107 = vand.u32 %v138, 4294901760
  %v1108 = vsub.f32 %v138, %v1107
  %v1109 = vand.u32 %v1108, 4294901760
  %1110 = vmatpush1.msra.mxu0 %v1109
  %1111 = vmatprep.subr.mxu0 0.0
  %v1112 = vand.u32 %v139, 4294901760
  %v1113 = vsub.f32 %v139, %v1112
  %v1114 = vand.u32 %v1113, 4294901760
  %1115 = vmatpush1.msra.mxu0 %v1114
  %1116 = vmatprep.subr.mxu0 0.0
  %v1117 = vand.u32 %v140, 4294901760
  %v1118 = vsub.f32 %v140, %v1117
  %v1119 = vand.u32 %v1118, 4294901760
  %1120 = vmatpush1.msra.mxu0 %v1119
  %1121 = vmatprep.subr.mxu0 0.0
  %1122 = vmatpush1.msra.mxu0 0.0
  %1123 = vmatprep.subr.mxu0 0.0
  %1124 = vmatpush1.msra.mxu0 0.0
  %1125 = vmatprep.subr.mxu0 0.0
  %1126 = vmatpush1.msra.mxu0 0.0
  %1127 = vmatprep.subr.mxu0 0.0
  %1128 = vmatpush1.msra.mxu0 0.0
  %1129 = vmatprep.subr.mxu0 0.0
  %1130 = vmatpush1.msra.mxu0 0.0
  %1131 = vmatprep.subr.mxu0 0.0
  %1132 = vmatpush1.msra.mxu0 0.0
  %1133 = vmatprep.subr.mxu0 0.0
  %1134 = vmatpush1.msra.mxu0 0.0
  %1135 = vmatprep.subr.mxu0 0.0
  %1136 = vmatpush1.msra.mxu0 0.0
  %1137 = vmatprep.subr.mxu0 0.0
  %1138 = vmatpush1.msra.mxu0 0.0
  %1139 = vmatprep.subr.mxu0 0.0
  %1140 = vmatpush1.msra.mxu0 0.0
  %1141 = vmatprep.subr.mxu0 0.0
  %1142 = vmatpush1.msra.mxu0 0.0
  %1143 = vmatprep.subr.mxu0 0.0
  %1144 = vmatpush1.msra.mxu0 0.0
  %1145 = vmatprep.subr.mxu0 0.0
  %1146 = vmatpush1.msra.mxu0 0.0
  %1147 = vmatprep.subr.mxu0 0.0
  %1148 = vmatpush1.msra.mxu0 0.0
  %1149 = vmatprep.subr.mxu0 0.0
  %1150 = vmatpush1.msra.mxu0 0.0
  %1151 = vmatprep.subr.mxu0 0.0
  %1152 = vmatpush1.msra.mxu0 0.0
  %1153 = vmatprep.mubr.f32.mxu0 0.0
  %v1154 = vand.u32 %v109, 4294901760
  %1155 = vmatmul.mubr.f32.gmra.mrb[0].mxu0 %v1154
  %v1156 = vpop.f32.mrb[0].mxu0
  %v1157 = vadd.f32 %v918, %v1156
  %v1158 = vpop.f32.mrb[0].mxu0
  %1159 = vmatprep.mubr.f32.mxu0 0.0
  %v1160 = vand.u32 %v110, 4294901760
  %1161 = vmatmul.mubr.f32.gmra.mrb[0].mxu0 %v1160
  %v1162 = vpop.f32.mrb[0].mxu0
  %v1163 = vadd.f32 %v926, %v1162
  %v1164 = vpop.f32.mrb[0].mxu0
  %1165 = vmatprep.mubr.f32.mxu0 0.0
  %v1166 = vand.u32 %v111, 4294901760
  %1167 = vmatmul.mubr.f32.gmra.mrb[0].mxu0 %v1166
  %v1168 = vpop.f32.mrb[0].mxu0
  %v1169 = vadd.f32 %v934, %v1168
  %v1170 = vpop.f32.mrb[0].mxu0
  %1171 = vmatprep.mubr.f32.mxu0 0.0
  %v1172 = vand.u32 %v112, 4294901760
  %1173 = vmatmul.mubr.f32.gmra.mrb[0].mxu0 %v1172
  %v1174 = vpop.f32.mrb[0].mxu0
  %v1175 = vadd.f32 %v942, %v1174
  %v1176 = vpop.f32.mrb[0].mxu0
  %1177 = vmatprep.mubr.f32.mxu0 0.0
  %v1178 = vand.u32 %v113, 4294901760
  %1179 = vmatmul.mubr.f32.gmra.mrb[0].mxu0 %v1178
  %v1180 = vpop.f32.mrb[0].mxu0
  %v1181 = vadd.f32 %v950, %v1180
  %v1182 = vpop.f32.mrb[0].mxu0
  %1183 = vmatprep.mubr.f32.mxu0 0.0
  %v1184 = vand.u32 %v114, 4294901760
  %1185 = vmatmul.mubr.f32.gmra.mrb[0].mxu0 %v1184
  %v1186 = vpop.f32.mrb[0].mxu0
  %v1187 = vadd.f32 %v958, %v1186
  %v1188 = vpop.f32.mrb[0].mxu0
  %1189 = vmatprep.mubr.f32.mxu0 0.0
  %v1190 = vand.u32 %v115, 4294901760
  %1191 = vmatmul.mubr.f32.gmra.mrb[0].mxu0 %v1190
  %v1192 = vpop.f32.mrb[0].mxu0
  %v1193 = vadd.f32 %v966, %v1192
  %v1194 = vpop.f32.mrb[0].mxu0
  %1195 = vmatprep.mubr.f32.mxu0 0.0
  %v1196 = vand.u32 %v116, 4294901760
  %1197 = vmatmul.mubr.f32.gmra.mrb[0].mxu0 %v1196
  %v1198 = vpop.f32.mrb[0].mxu0
  %v1199 = vadd.f32 %v974, %v1198
  %v1200 = vpop.f32.mrb[0].mxu0
  %1201 = vmatprep.mubr.f32.mxu0 0.0
  %v1202 = vand.u32 %v117, 4294901760
  %1203 = vmatmul.mubr.f32.gmra.mrb[0].mxu0 %v1202
  %v1204 = vpop.f32.mrb[0].mxu0
  %v1205 = vadd.f32 %v982, %v1204
  %v1206 = vpop.f32.mrb[0].mxu0
  %1207 = vmatprep.mubr.f32.mxu0 0.0
  %v1208 = vand.u32 %v118, 4294901760
  %1209 = vmatmul.mubr.f32.gmra.mrb[0].mxu0 %v1208
  %v1210 = vpop.f32.mrb[0].mxu0
  %v1211 = vadd.f32 %v990, %v1210
  %v1212 = vpop.f32.mrb[0].mxu0
  %1213 = vmatprep.mubr.f32.mxu0 0.0
  %v1214 = vand.u32 %v119, 4294901760
  %1215 = vmatmul.mubr.f32.gmra.mrb[0].mxu0 %v1214
  %v1216 = vpop.f32.mrb[0].mxu0
  %v1217 = vadd.f32 %v998, %v1216
  %v1218 = vpop.f32.mrb[0].mxu0
  %1219 = vmatprep.mubr.f32.mxu0 0.0
  %v1220 = vand.u32 %v120, 4294901760
  %1221 = vmatmul.mubr.f32.gmra.mrb[0].mxu0 %v1220
  %v1222 = vpop.f32.mrb[0].mxu0
  %v1223 = vadd.f32 %v1006, %v1222
  %v1224 = vpop.f32.mrb[0].mxu0
  %1225 = vmatprep.mubr.f32.mxu0 0.0
  %v1226 = vand.u32 %v121, 4294901760
  %1227 = vmatmul.mubr.f32.gmra.mrb[0].mxu0 %v1226
  %v1228 = vpop.f32.mrb[0].mxu0
  %v1229 = vadd.f32 %v1014, %v1228
  %v1230 = vpop.f32.mrb[0].mxu0
  %1231 = vmatprep.mubr.f32.mxu0 0.0
  %v1232 = vand.u32 %v122, 4294901760
  %1233 = vmatmul.mubr.f32.gmra.mrb[0].mxu0 %v1232
  %v1234 = vpop.f32.mrb[0].mxu0
  %v1235 = vadd.f32 %v1022, %v1234
  %v1236 = vpop.f32.mrb[0].mxu0
  %1237 = vmatprep.mubr.f32.mxu0 0.0
  %v1238 = vand.u32 %v123, 4294901760
  %1239 = vmatmul.mubr.f32.gmra.mrb[0].mxu0 %v1238
  %v1240 = vpop.f32.mrb[0].mxu0
  %v1241 = vadd.f32 %v1030, %v1240
  %v1242 = vpop.f32.mrb[0].mxu0
  %1243 = vmatprep.mubr.f32.mxu0 0.0
  %v1244 = vand.u32 %v124, 4294901760
  %1245 = vmatmul.mubr.f32.gmra.mrb[0].mxu0 %v1244
  %v1246 = vpop.f32.mrb[0].mxu0
  %v1247 = vadd.f32 %v1038, %v1246
  %v1248 = vpop.f32.mrb[0].mxu0
  %1249 = vdwg.mxu0
  %1250 = vmatprep.subr.mxu0 0.0
  %v1251 = vand.u32 %v125, 4294901760
  %1252 = vmatpush1.msra.mxu0 %v1251
  %1253 = vmatprep.subr.mxu0 0.0
  %v1254 = vand.u32 %v126, 4294901760
  %1255 = vmatpush1.msra.mxu0 %v1254
  %1256 = vmatprep.subr.mxu0 0.0
  %v1257 = vand.u32 %v127, 4294901760
  %1258 = vmatpush1.msra.mxu0 %v1257
  %1259 = vmatprep.subr.mxu0 0.0
  %v1260 = vand.u32 %v128, 4294901760
  %1261 = vmatpush1.msra.mxu0 %v1260
  %1262 = vmatprep.subr.mxu0 0.0
  %v1263 = vand.u32 %v129, 4294901760
  %1264 = vmatpush1.msra.mxu0 %v1263
  %1265 = vmatprep.subr.mxu0 0.0
  %v1266 = vand.u32 %v130, 4294901760
  %1267 = vmatpush1.msra.mxu0 %v1266
  %1268 = vmatprep.subr.mxu0 0.0
  %v1269 = vand.u32 %v131, 4294901760
  %1270 = vmatpush1.msra.mxu0 %v1269
  %1271 = vmatprep.subr.mxu0 0.0
  %v1272 = vand.u32 %v132, 4294901760
  %1273 = vmatpush1.msra.mxu0 %v1272
  %1274 = vmatprep.subr.mxu0 0.0
  %v1275 = vand.u32 %v133, 4294901760
  %1276 = vmatpush1.msra.mxu0 %v1275
  %1277 = vmatprep.subr.mxu0 0.0
  %v1278 = vand.u32 %v134, 4294901760
  %1279 = vmatpush1.msra.mxu0 %v1278
  %1280 = vmatprep.subr.mxu0 0.0
  %v1281 = vand.u32 %v135, 4294901760
  %1282 = vmatpush1.msra.mxu0 %v1281
  %1283 = vmatprep.subr.mxu0 0.0
  %v1284 = vand.u32 %v136, 4294901760
  %1285 = vmatpush1.msra.mxu0 %v1284
  %1286 = vmatprep.subr.mxu0 0.0
  %v1287 = vand.u32 %v137, 4294901760
  %1288 = vmatpush1.msra.mxu0 %v1287
  %1289 = vmatprep.subr.mxu0 0.0
  %v1290 = vand.u32 %v138, 4294901760
  %1291 = vmatpush1.msra.mxu0 %v1290
  %1292 = vmatprep.subr.mxu0 0.0
  %v1293 = vand.u32 %v139, 4294901760
  %1294 = vmatpush1.msra.mxu0 %v1293
  %1295 = vmatprep.subr.mxu0 0.0
  %v1296 = vand.u32 %v140, 4294901760
  %1297 = vmatpush1.msra.mxu0 %v1296
  %1298 = vmatprep.subr.mxu0 0.0
  %1299 = vmatpush1.msra.mxu0 0.0
  %1300 = vmatprep.subr.mxu0 0.0
  %1301 = vmatpush1.msra.mxu0 0.0
  %1302 = vmatprep.subr.mxu0 0.0
  %1303 = vmatpush1.msra.mxu0 0.0
  %1304 = vmatprep.subr.mxu0 0.0
  %1305 = vmatpush1.msra.mxu0 0.0
  %1306 = vmatprep.subr.mxu0 0.0
  %1307 = vmatpush1.msra.mxu0 0.0
  %1308 = vmatprep.subr.mxu0 0.0
  %1309 = vmatpush1.msra.mxu0 0.0
  %1310 = vmatprep.subr.mxu0 0.0
  %1311 = vmatpush1.msra.mxu0 0.0
  %1312 = vmatprep.subr.mxu0 0.0
  %1313 = vmatpush1.msra.mxu0 0.0
  %1314 = vmatprep.subr.mxu0 0.0
  %1315 = vmatpush1.msra.mxu0 0.0
  %1316 = vmatprep.subr.mxu0 0.0
  %1317 = vmatpush1.msra.mxu0 0.0
  %1318 = vmatprep.subr.mxu0 0.0
  %1319 = vmatpush1.msra.mxu0 0.0
  %1320 = vmatprep.subr.mxu0 0.0
  %1321 = vmatpush1.msra.mxu0 0.0
  %1322 = vmatprep.subr.mxu0 0.0
  %1323 = vmatpush1.msra.mxu0 0.0
  %1324 = vmatprep.subr.mxu0 0.0
  %1325 = vmatpush1.msra.mxu0 0.0
  %1326 = vmatprep.subr.mxu0 0.0
  %1327 = vmatpush1.msra.mxu0 0.0
  %1328 = vmatprep.subr.mxu0 0.0
  %1329 = vmatpush1.msra.mxu0 0.0
  %1330 = vmatprep.mubr.f32.mxu0 0.0
  %v1331 = vand.u32 %v109, 4294901760
  %1332 = vmatmul.mubr.f32.gmra.mrb[0].mxu0 %v1331
  %v1333 = vpop.f32.mrb[0].mxu0
  %v1334 = vadd.f32 %v1157, %v1333
  %v1335 = vpop.f32.mrb[0].mxu0
  %1336 = vmatprep.mubr.f32.mxu0 0.0
  %v1337 = vand.u32 %v110, 4294901760
  %1338 = vmatmul.mubr.f32.gmra.mrb[0].mxu0 %v1337
  %v1339 = vpop.f32.mrb[0].mxu0
  %v1340 = vadd.f32 %v1163, %v1339
  %v1341 = vpop.f32.mrb[0].mxu0
  %1342 = vmatprep.mubr.f32.mxu0 0.0
  %v1343 = vand.u32 %v111, 4294901760
  %1344 = vmatmul.mubr.f32.gmra.mrb[0].mxu0 %v1343
  %v1345 = vpop.f32.mrb[0].mxu0
  %v1346 = vadd.f32 %v1169, %v1345
  %v1347 = vpop.f32.mrb[0].mxu0
  %1348 = vmatprep.mubr.f32.mxu0 0.0
  %v1349 = vand.u32 %v112, 4294901760
  %1350 = vmatmul.mubr.f32.gmra.mrb[0].mxu0 %v1349
  %v1351 = vpop.f32.mrb[0].mxu0
  %v1352 = vadd.f32 %v1175, %v1351
  %v1353 = vpop.f32.mrb[0].mxu0
  %1354 = vmatprep.mubr.f32.mxu0 0.0
  %v1355 = vand.u32 %v113, 4294901760
  %1356 = vmatmul.mubr.f32.gmra.mrb[0].mxu0 %v1355
  %v1357 = vpop.f32.mrb[0].mxu0
  %v1358 = vadd.f32 %v1181, %v1357
  %v1359 = vpop.f32.mrb[0].mxu0
  %1360 = vmatprep.mubr.f32.mxu0 0.0
  %v1361 = vand.u32 %v114, 4294901760
  %1362 = vmatmul.mubr.f32.gmra.mrb[0].mxu0 %v1361
  %v1363 = vpop.f32.mrb[0].mxu0
  %v1364 = vadd.f32 %v1187, %v1363
  %v1365 = vpop.f32.mrb[0].mxu0
  %1366 = vmatprep.mubr.f32.mxu0 0.0
  %v1367 = vand.u32 %v115, 4294901760
  %1368 = vmatmul.mubr.f32.gmra.mrb[0].mxu0 %v1367
  %v1369 = vpop.f32.mrb[0].mxu0
  %v1370 = vadd.f32 %v1193, %v1369
  %v1371 = vpop.f32.mrb[0].mxu0
  %1372 = vmatprep.mubr.f32.mxu0 0.0
  %v1373 = vand.u32 %v116, 4294901760
  %1374 = vmatmul.mubr.f32.gmra.mrb[0].mxu0 %v1373
  %v1375 = vpop.f32.mrb[0].mxu0
  %v1376 = vadd.f32 %v1199, %v1375
  %v1377 = vpop.f32.mrb[0].mxu0
  %1378 = vmatprep.mubr.f32.mxu0 0.0
  %v1379 = vand.u32 %v117, 4294901760
  %1380 = vmatmul.mubr.f32.gmra.mrb[0].mxu0 %v1379
  %v1381 = vpop.f32.mrb[0].mxu0
  %v1382 = vadd.f32 %v1205, %v1381
  %v1383 = vpop.f32.mrb[0].mxu0
  %1384 = vmatprep.mubr.f32.mxu0 0.0
  %v1385 = vand.u32 %v118, 4294901760
  %1386 = vmatmul.mubr.f32.gmra.mrb[0].mxu0 %v1385
  %v1387 = vpop.f32.mrb[0].mxu0
  %v1388 = vadd.f32 %v1211, %v1387
  %v1389 = vpop.f32.mrb[0].mxu0
  %1390 = vmatprep.mubr.f32.mxu0 0.0
  %v1391 = vand.u32 %v119, 4294901760
  %1392 = vmatmul.mubr.f32.gmra.mrb[0].mxu0 %v1391
  %v1393 = vpop.f32.mrb[0].mxu0
  %v1394 = vadd.f32 %v1217, %v1393
  %v1395 = vpop.f32.mrb[0].mxu0
  %1396 = vmatprep.mubr.f32.mxu0 0.0
  %v1397 = vand.u32 %v120, 4294901760
  %1398 = vmatmul.mubr.f32.gmra.mrb[0].mxu0 %v1397
  %v1399 = vpop.f32.mrb[0].mxu0
  %v1400 = vadd.f32 %v1223, %v1399
  %v1401 = vpop.f32.mrb[0].mxu0
  %1402 = vmatprep.mubr.f32.mxu0 0.0
  %v1403 = vand.u32 %v121, 4294901760
  %1404 = vmatmul.mubr.f32.gmra.mrb[0].mxu0 %v1403
  %v1405 = vpop.f32.mrb[0].mxu0
  %v1406 = vadd.f32 %v1229, %v1405
  %v1407 = vpop.f32.mrb[0].mxu0
  %1408 = vmatprep.mubr.f32.mxu0 0.0
  %v1409 = vand.u32 %v122, 4294901760
  %1410 = vmatmul.mubr.f32.gmra.mrb[0].mxu0 %v1409
  %v1411 = vpop.f32.mrb[0].mxu0
  %v1412 = vadd.f32 %v1235, %v1411
  %v1413 = vpop.f32.mrb[0].mxu0
  %1414 = vmatprep.mubr.f32.mxu0 0.0
  %v1415 = vand.u32 %v123, 4294901760
  %1416 = vmatmul.mubr.f32.gmra.mrb[0].mxu0 %v1415
  %v1417 = vpop.f32.mrb[0].mxu0
  %v1418 = vadd.f32 %v1241, %v1417
  %v1419 = vpop.f32.mrb[0].mxu0
  %1420 = vmatprep.mubr.f32.mxu0 0.0
  %v1421 = vand.u32 %v124, 4294901760
  %1422 = vmatmul.mubr.f32.gmra.mrb[0].mxu0 %v1421
  %v1423 = vpop.f32.mrb[0].mxu0
  %v1424 = vadd.f32 %v1247, %v1423
  %v1425 = vpop.f32.mrb[0].mxu0
  %1426 = vdwg.mxu0
  %1427 = vst [vmem:[%s2] sm:$0xff] %v1334
  %1428 = vst [vmem:[%s2 + $0x8] sm:$0xff] %v1340
  %1429 = vst [vmem:[%s2 + $0x10] sm:$0xff] %v1346
  %1430 = vst [vmem:[%s2 + $0x18] sm:$0xff] %v1352
  %1431 = vst [vmem:[%s2 + $0x20] sm:$0xff] %v1358
  %1432 = vst [vmem:[%s2 + $0x28] sm:$0xff] %v1364
  %1433 = vst [vmem:[%s2 + $0x30] sm:$0xff] %v1370
  %1434 = vst [vmem:[%s2 + $0x38] sm:$0xff] %v1376
  %1435 = vst [vmem:[%s2 + $0x40] sm:$0xff] %v1382
  %1436 = vst [vmem:[%s2 + $0x48] sm:$0xff] %v1388
  %1437 = vst [vmem:[%s2 + $0x50] sm:$0xff] %v1394
  %1438 = vst [vmem:[%s2 + $0x58] sm:$0xff] %v1400
  %1439 = vst [vmem:[%s2 + $0x60] sm:$0xff] %v1406
  %1440 = vst [vmem:[%s2 + $0x68] sm:$0xff] %v1412
  %1441 = vst [vmem:[%s2 + $0x70] sm:$0xff] %v1418
  %1442 = vst [vmem:[%s2 + $0x78] sm:$0xff] %v1424
  // Predicated region
  $region10: #{_lookup_impl.1} parent=0 // pred_check
    _
  $region11: #{_lookup_impl.1} parent=0 // pred_check_branch
    %1444 = sbr.rel (0) target = $region13
  $region12: #{_lookup_impl.1} parent=0 // pred_region
    _
  $region13: #{_lookup_impl.1} parent=0 // pred_fallthru
    _
  // Predicated region
  $region14: #{_lookup_impl.1} parent=0 // pred_check
    _
  $region15: #{_lookup_impl.1} parent=0 // pred_check_branch
    %1446 = sbr.rel (0) target = $region17
  $region16: #{_lookup_impl.1} parent=0 // pred_region
    _
  $region17: #{_lookup_impl.1} parent=0 // pred_fallthru
    _

</llo_original>
